<compile_context>
chip_gen: v6e
topology: v6e:2x2x1
jax: 0.10.0
libtpu: 0.0.40
codegen_flags: <defaults>
</compile_context>

<pallas_src>
import math

import jax
import jax.numpy as jnp
from jax.experimental import pallas as pl
from jax.experimental.pallas import tpu as pltpu

INPUT_SIZE = 32
HIDDEN = 64
OUT = 2
MAX_BATCH_TILE = 2048


def mlp_kernel(x_ref, w1_ref, b1_ref, w2_ref, b2_ref, w3_ref, b3_ref, o_ref):
    # One batch tile; weights/biases resident in VMEM across the grid.
    x = x_ref[...].astype(jnp.bfloat16)                 # (TB, 32) cast in-kernel

    # Layer 1: bf16 MXU matmul, f32 accumulate, f32 bias+ReLU epilogue.
    h = jnp.dot(x, w1_ref[...], preferred_element_type=jnp.float32)   # (TB, 64)
    h = jnp.maximum(h + b1_ref[...], 0.0)

    # Layer 2.
    h = jnp.dot(h.astype(jnp.bfloat16), w2_ref[...],
                preferred_element_type=jnp.float32)                    # (TB, 64)
    h = jnp.maximum(h + b2_ref[...], 0.0)

    # Layer 3: narrow (TB, 2) output; tiny masked store is free (huge slack).
    y = jnp.dot(h.astype(jnp.bfloat16), w3_ref[...],
                preferred_element_type=jnp.float32)                    # (TB, 2)
    o_ref[...] = (y + b3_ref[...]).astype(o_ref.dtype)


def _choose_batch_tile(batch):
    """Multiple-of-8 tile, <= MAX_BATCH_TILE, >=2 tiles when batch permits."""
    half = (batch + 1) // 2
    half = max(8, ((half + 7) // 8) * 8)
    return min(MAX_BATCH_TILE, half)


def prepare_params(w1, b1, w2, b2, w3, b3):
    """One-time cast/reshape of parameters (hoisted out of the hot path)."""
    return (w1.astype(jnp.bfloat16), b1.reshape(1, HIDDEN).astype(jnp.float32),
            w2.astype(jnp.bfloat16), b2.reshape(1, HIDDEN).astype(jnp.float32),
            w3.astype(jnp.bfloat16), b3.reshape(1, OUT).astype(jnp.float32))


@jax.jit
def mlp_forward(x, w1_bf, b1_r, w2_bf, b2_r, w3_bf, b3_r):
    """x: (B, 32) f32. Prepared params from prepare_params(). Returns (B, 2) f32."""
    B, F = x.shape
    assert F == INPUT_SIZE

    tile = _choose_batch_tile(B)
    n_tiles = pl.cdiv(B, tile)
    B_pad = n_tiles * tile
    padded = B_pad != B
    if padded:
        x = jnp.pad(x, ((0, B_pad - B), (0, 0)))

    def rep(shape):
        # Weight / bias blocks: full array, constant block index across the
        # batch grid axis (fetched once, held resident).
        return pl.BlockSpec(shape, lambda i: (0, 0))

    flops = 2 * B_pad * (INPUT_SIZE * HIDDEN + HIDDEN * HIDDEN + HIDDEN * OUT)
    bytes_accessed = (x.size * 4 +
                      (w1_bf.size + w2_bf.size + w3_bf.size) * 2 +
                      (b1_r.size + b2_r.size + b3_r.size) * 4 +
                      B_pad * OUT * 4)

    y = pl.pallas_call(
        mlp_kernel,
        out_shape=jax.ShapeDtypeStruct((B_pad, OUT), jnp.float32),
        grid_spec=pl.GridSpec(
            grid=(n_tiles,),
            in_specs=[
                pl.BlockSpec((tile, INPUT_SIZE), lambda i: (i, 0)),  # x tile
                rep((INPUT_SIZE, HIDDEN)),   # w1
                rep((1, HIDDEN)),            # b1
                rep((HIDDEN, HIDDEN)),       # w2
                rep((1, HIDDEN)),            # b2
                rep((HIDDEN, OUT)),          # w3
                rep((1, OUT)),               # b3
            ],
            out_specs=pl.BlockSpec((tile, OUT), lambda i: (i, 0)),
        ),
        compiler_params=pltpu.CompilerParams(
            dimension_semantics=("parallel",)),
        cost_estimate=pl.CostEstimate(
            flops=flops, transcendentals=0, bytes_accessed=bytes_accessed),
    )(x, w1_bf, b1_r, w2_bf, b2_r, w3_bf, b3_r)

    return y[:B] if padded else y


def init_linear(key, fan_in, fan_out):
    # PyTorch nn.Linear default init: U(-1/sqrt(fan_in), 1/sqrt(fan_in)),
    # stored as [in, out] (transpose of PyTorch's [out, in]).
    kw, kb = jax.random.split(key)
    bound = 1.0 / math.sqrt(fan_in)
    w = jax.random.uniform(kw, (fan_in, fan_out), jnp.float32, -bound, bound)
    b = jax.random.uniform(kb, (fan_out,), jnp.float32, -bound, bound)
    return w, b


def reference_forward(x, w1, b1, w2, b2, w3, b3):
    # Full-f32 reference of the PyTorch module's forward.
    h = jnp.maximum(x @ w1 + b1, 0.0)
    h = jnp.maximum(h @ w2 + b2, 0.0)
    return h @ w3 + b3


if __name__ == "__main__":
    key = jax.random.PRNGKey(0)
    kx, k1, k2, k3 = jax.random.split(key, 4)

    B = 8
    x = jax.random.normal(kx, (B, INPUT_SIZE), jnp.float32)

    w1, b1 = init_linear(k1, INPUT_SIZE, HIDDEN)
    w2, b2 = init_linear(k2, HIDDEN, HIDDEN)
    w3, b3 = init_linear(k3, HIDDEN, OUT)

    params = prepare_params(w1, b1, w2, b2, w3, b3)
    out = mlp_forward(x, *params)
    out = jax.block_until_ready(out)

    ref = reference_forward(x, w1, b1, w2, b2, w3, b3)
    assert out.shape == (B, OUT)
    # Kernel uses bf16 matmul operands with f32 accumulation -> loose tolerance
    # vs the full-f32 reference.
    assert jnp.allclose(out, ref, atol=5e-2, rtol=5e-2), (
        float(jnp.max(jnp.abs(out - ref))))

    print("KERNEL_OK")
</pallas_src>

<mosaic_0001>
module attributes {stable_mosaic.version = 11 : i64} {
  func.func @mlp_kernel(%arg0: i32, %arg1: memref<8x32xf32, #tpu.memory_space<vmem>>, %arg2: memref<32x64xbf16, #tpu.memory_space<vmem>>, %arg3: memref<1x64xf32, #tpu.memory_space<vmem>>, %arg4: memref<64x64xbf16, #tpu.memory_space<vmem>>, %arg5: memref<1x64xf32, #tpu.memory_space<vmem>>, %arg6: memref<64x2xbf16, #tpu.memory_space<vmem>>, %arg7: memref<1x2xf32, #tpu.memory_space<vmem>>, %arg8: memref<8x2xf32, #tpu.memory_space<vmem>>) attributes {dimension_semantics = [#tpu.dimension_semantics<parallel>], iteration_bounds = array<i64: 1>, scalar_prefetch = 0 : i64, scratch_operands = 0 : i64, tpu.core_type = #tpu.core_type<tc>, window_params = [{transform_indices = @transform_0, window_bounds = array<i64: 8, 32>}, {pipeline_mode = #tpu.pipeline_mode<synchronous>, transform_indices = @transform_1, window_bounds = array<i64: 32, 64>}, {pipeline_mode = #tpu.pipeline_mode<synchronous>, transform_indices = @transform_2, window_bounds = array<i64: 1, 64>}, {pipeline_mode = #tpu.pipeline_mode<synchronous>, transform_indices = @transform_3, window_bounds = array<i64: 64, 64>}, {pipeline_mode = #tpu.pipeline_mode<synchronous>, transform_indices = @transform_4, window_bounds = array<i64: 1, 64>}, {pipeline_mode = #tpu.pipeline_mode<synchronous>, transform_indices = @transform_5, window_bounds = array<i64: 64, 2>}, {pipeline_mode = #tpu.pipeline_mode<synchronous>, transform_indices = @transform_6, window_bounds = array<i64: 1, 2>}, {transform_indices = @transform_7, window_bounds = array<i64: 8, 2>}]} {
    %c0 = arith.constant 0 : index
    %c0_0 = arith.constant 0 : index
    %0 = vector.load %arg1[%c0, %c0_0] : memref<8x32xf32, #tpu.memory_space<vmem>>, vector<8x32xf32>
    %1 = arith.truncf %0 : vector<8x32xf32> to vector<8x32xbf16>
    %c0_1 = arith.constant 0 : index
    %c0_2 = arith.constant 0 : index
    %2 = vector.load %arg2[%c0_1, %c0_2] : memref<32x64xbf16, #tpu.memory_space<vmem>>, vector<32x64xbf16>
    %cst = arith.constant dense<0.000000e+00> : vector<8x64xf32>
    %3 = tpu.matmul %1, %2, %cst {dimension_numbers = #tpu.dot_dimension_numbers<[1], [0], [0], [1], [0, 0, 1, 1], [], []>} : vector<8x32xbf16>, vector<32x64xbf16>, vector<8x64xf32> -> vector<8x64xf32>
    %c0_3 = arith.constant 0 : index
    %c0_4 = arith.constant 0 : index
    %4 = vector.load %arg3[%c0_3, %c0_4] : memref<1x64xf32, #tpu.memory_space<vmem>>, vector<1x64xf32>
    %5 = vector.broadcast %4 : vector<1x64xf32> to vector<8x64xf32>
    %6 = arith.addf %3, %5 : vector<8x64xf32>
    %cst_5 = arith.constant 0.000000e+00 : f32
    %7 = vector.broadcast %cst_5 : f32 to vector<8x64xf32>
    %8 = arith.maximumf %6, %7 : vector<8x64xf32>
    %9 = arith.truncf %8 : vector<8x64xf32> to vector<8x64xbf16>
    %c0_6 = arith.constant 0 : index
    %c0_7 = arith.constant 0 : index
    %10 = vector.load %arg4[%c0_6, %c0_7] : memref<64x64xbf16, #tpu.memory_space<vmem>>, vector<64x64xbf16>
    %cst_8 = arith.constant dense<0.000000e+00> : vector<8x64xf32>
    %11 = tpu.matmul %9, %10, %cst_8 {dimension_numbers = #tpu.dot_dimension_numbers<[1], [0], [0], [1], [0, 0, 1, 1], [], []>} : vector<8x64xbf16>, vector<64x64xbf16>, vector<8x64xf32> -> vector<8x64xf32>
    %c0_9 = arith.constant 0 : index
    %c0_10 = arith.constant 0 : index
    %12 = vector.load %arg5[%c0_9, %c0_10] : memref<1x64xf32, #tpu.memory_space<vmem>>, vector<1x64xf32>
    %13 = vector.broadcast %12 : vector<1x64xf32> to vector<8x64xf32>
    %14 = arith.addf %11, %13 : vector<8x64xf32>
    %cst_11 = arith.constant 0.000000e+00 : f32
    %15 = vector.broadcast %cst_11 : f32 to vector<8x64xf32>
    %16 = arith.maximumf %14, %15 : vector<8x64xf32>
    %17 = arith.truncf %16 : vector<8x64xf32> to vector<8x64xbf16>
    %c0_12 = arith.constant 0 : index
    %c0_13 = arith.constant 0 : index
    %18 = vector.load %arg6[%c0_12, %c0_13] : memref<64x2xbf16, #tpu.memory_space<vmem>>, vector<64x2xbf16>
    %cst_14 = arith.constant dense<0.000000e+00> : vector<8x2xf32>
    %19 = tpu.matmul %17, %18, %cst_14 {dimension_numbers = #tpu.dot_dimension_numbers<[1], [0], [0], [1], [0, 0, 1, 1], [], []>} : vector<8x64xbf16>, vector<64x2xbf16>, vector<8x2xf32> -> vector<8x2xf32>
    %c0_15 = arith.constant 0 : index
    %c0_16 = arith.constant 0 : index
    %20 = vector.load %arg7[%c0_15, %c0_16] : memref<1x2xf32, #tpu.memory_space<vmem>>, vector<1x2xf32>
    %21 = vector.broadcast %20 : vector<1x2xf32> to vector<8x2xf32>
    %22 = arith.addf %19, %21 : vector<8x2xf32>
    %c0_17 = arith.constant 0 : index
    %c0_18 = arith.constant 0 : index
    %23 = vector.load %arg8[%c0_17, %c0_18] : memref<8x2xf32, #tpu.memory_space<vmem>>, vector<8x2xf32>
    tpu.vector_store %arg8[%c0_17, %c0_18], %22 {strides = array<i32>} : memref<8x2xf32, #tpu.memory_space<vmem>>, vector<8x2xf32>,
    return
  }
  func.func @transform_0(%arg0: i32) -> (i32, i32) {
    %c0_i32 = arith.constant 0 : i32
    %c0_i32_0 = arith.constant 0 : i32
    return %arg0, %c0_i32 : i32, i32
  }
  func.func @transform_1(%arg0: i32) -> (i32, i32) {
    %c0_i32 = arith.constant 0 : i32
    %c0_i32_0 = arith.constant 0 : i32
    %c0_i32_1 = arith.constant 0 : i32
    return %c0_i32, %c0_i32_0 : i32, i32
  }
  func.func @transform_2(%arg0: i32) -> (i32, i32) {
    %c0_i32 = arith.constant 0 : i32
    %c0_i32_0 = arith.constant 0 : i32
    %c0_i32_1 = arith.constant 0 : i32
    return %c0_i32, %c0_i32_0 : i32, i32
  }
  func.func @transform_3(%arg0: i32) -> (i32, i32) {
    %c0_i32 = arith.constant 0 : i32
    %c0_i32_0 = arith.constant 0 : i32
    %c0_i32_1 = arith.constant 0 : i32
    return %c0_i32, %c0_i32_0 : i32, i32
  }
  func.func @transform_4(%arg0: i32) -> (i32, i32) {
    %c0_i32 = arith.constant 0 : i32
    %c0_i32_0 = arith.constant 0 : i32
    %c0_i32_1 = arith.constant 0 : i32
    return %c0_i32, %c0_i32_0 : i32, i32
  }
  func.func @transform_5(%arg0: i32) -> (i32, i32) {
    %c0_i32 = arith.constant 0 : i32
    %c0_i32_0 = arith.constant 0 : i32
    %c0_i32_1 = arith.constant 0 : i32
    return %c0_i32, %c0_i32_0 : i32, i32
  }
  func.func @transform_6(%arg0: i32) -> (i32, i32) {
    %c0_i32 = arith.constant 0 : i32
    %c0_i32_0 = arith.constant 0 : i32
    %c0_i32_1 = arith.constant 0 : i32
    return %c0_i32, %c0_i32_0 : i32, i32
  }
  func.func @transform_7(%arg0: i32) -> (i32, i32) {
    %c0_i32 = arith.constant 0 : i32
    %c0_i32_0 = arith.constant 0 : i32
    return %arg0, %c0_i32 : i32, i32
  }
}

</mosaic_0001>

<llo_original>
// kernel: mlp_forward.1
$region0: #{mlp_forward.1}
  #allocation0 [shape = 'u32[]', space=smem, size = 0x4, offset = 0x4, fixed_abs, tag = 'smem constant byte address 0x4 - core index']
  #allocation1 [shape = 'u32[144,128]{1,0:T(1,128)}', space=vmem, size = 0x12000, scoped, tag = 'internal scratch']
  %s0 = inlined_call_operand.hbm [shape: f32[8,32], index: 0, kind: input, shape index: {}]
  %s1 = inlined_call_operand.hbm [shape: bf16[32,64], index: 1, kind: input, shape index: {}]
  %s2 = inlined_call_operand.vmem [shape: f32[1,64], index: 2, kind: input, shape index: {}]
  %s3 = inlined_call_operand.vmem [shape: bf16[64,64], index: 3, kind: input, shape index: {}]
  %s4 = inlined_call_operand.vmem [shape: f32[1,64], index: 4, kind: input, shape index: {}]
  %s5 = inlined_call_operand.vmem [shape: bf16[64,2], index: 5, kind: input, shape index: {}]
  %s6 = inlined_call_operand.vmem [shape: f32[1,2], index: 6, kind: input, shape index: {}]
  %s7 = inlined_call_operand.vmem [shape: f32[8,2], index: 7, kind: output, shape index: {}]
  %s8 = sld [smem:[#allocation0]]
  $region46: #{mlp_forward.1} parent=0
    _
  %s10 = ssub.s32 1, %s8
  %s11 = scalar_select 0, %s10, %s8
  $region1: #{mlp_forward.1} parent=0
    #allocation2 [shape = 'u8[4096]{0}', space=vmem, size = 0x1000, scoped, tag = 'input window, operand 0, single buffered']
    #allocation3 [shape = 's32[1]{0}', space=sflag, size = 0x4, scoped, tag = 'scoped memory for mlp_forward.1']
    #allocation4 [shape = 'u8[8192]{0}', space=vmem, size = 0x2000, scoped, tag = 'input window, operand 1, single buffered']
    #allocation5 [shape = 's32[1]{0}', space=sflag, size = 0x4, scoped, tag = 'scoped memory for mlp_forward.1']
    %12 = vsyncpa [#allocation3], 0
    %13 = vsyncpa [#allocation5], 0
    // Predicated region
    $region2: #{mlp_forward.1} parent=1 // pred_check
      _
    $region3: #{mlp_forward.1} parent=1 // pred_check_branch
      %15 = sbr.rel (0) target = $region5
    $region4: #{mlp_forward.1} parent=1 // pred_region
      %s17 = ssub.s32 128, 128
      %18 = vsyncadd [#allocation3], %s17
      %s20 = sshll.u32 [#allocation2], 4
      %s21 = int_to_ptr.vmem [resolvable:$true] %s20
      %23 = dma.hbm_to_vmem [thread:$0]  %s0, 128, %s21, [#allocation3]
    $region5: #{mlp_forward.1} parent=1 // pred_fallthru
      _
    // Predicated region
    $region6: #{mlp_forward.1} parent=1 // pred_check
      _
    $region7: #{mlp_forward.1} parent=1 // pred_check_branch
      %25 = sbr.rel (0) target = $region9
    $region8: #{mlp_forward.1} parent=1 // pred_region
      %s27 = ssub.s32 256, 256
      %28 = vsyncadd [#allocation5], %s27
      %s29 = sshll.u32 [#allocation4], 4
      %s30 = int_to_ptr.vmem [resolvable:$true] %s29
      %35 = dma.hbm_to_vmem [thread:$0]  %s1, 256, %s30, [#allocation5], 64, 64, 4
    $region9: #{mlp_forward.1} parent=1 // pred_fallthru
      _
    // Predicated region
    $region10: #{mlp_forward.1} parent=1 // pred_check
      _
    $region11: #{mlp_forward.1} parent=1 // pred_check_branch
      %37 = sbr.rel (0) target = $region13
    $region12: #{mlp_forward.1} parent=1 // pred_region
      _
    $region13: #{mlp_forward.1} parent=1 // pred_fallthru
      _
    // Predicated region
    $region14: #{mlp_forward.1} parent=1 // pred_check
      _
    $region15: #{mlp_forward.1} parent=1 // pred_check_branch
      %39 = sbr.rel (0) target = $region17
    $region16: #{mlp_forward.1} parent=1 // pred_region
      _
    $region17: #{mlp_forward.1} parent=1 // pred_fallthru
      _
    // Predicated region
    $region18: #{mlp_forward.1} parent=1 // pred_check
      _
    $region19: #{mlp_forward.1} parent=1 // pred_check_branch
      %41 = sbr.rel (0) target = $region21
    $region20: #{mlp_forward.1} parent=1 // pred_region
      _
    $region21: #{mlp_forward.1} parent=1 // pred_fallthru
      _
    // Predicated region
    $region22: #{mlp_forward.1} parent=1 // pred_check
      _
    $region23: #{mlp_forward.1} parent=1 // pred_check_branch
      %43 = sbr.rel (0) target = $region25
    $region24: #{mlp_forward.1} parent=1 // pred_region
      _
    $region25: #{mlp_forward.1} parent=1 // pred_fallthru
      _
    // Predicated region
    $region26: #{mlp_forward.1} parent=1 // pred_check
      _
    $region27: #{mlp_forward.1} parent=1 // pred_check_branch
      %45 = sbr.rel (0) target = $region29
    $region28: #{mlp_forward.1} parent=1 // pred_region
      _
    $region29: #{mlp_forward.1} parent=1 // pred_fallthru
      _
    // Predicated region
    $region30: #{mlp_forward.1} parent=1 // pred_check
      _
    $region31: #{mlp_forward.1} parent=1 // pred_check_branch
      %47 = sbr.rel (0) target = $region33
    $region32: #{mlp_forward.1} parent=1 // pred_region
      %48 = dma.done [#allocation3], 128
    $region33: #{mlp_forward.1} parent=1 // pred_fallthru
      _
    // Predicated region
    $region34: #{mlp_forward.1} parent=1 // pred_check
      _
    $region35: #{mlp_forward.1} parent=1 // pred_check_branch
      %50 = sbr.rel (0) target = $region37
    $region36: #{mlp_forward.1} parent=1 // pred_region
      %51 = dma.done [#allocation5], 256
    $region37: #{mlp_forward.1} parent=1 // pred_fallthru
      _
    %v53 = vld [vmem:[#allocation2] sm:$0xff]
    %v54 = vpack.c.bf16 %v53, %v53
    %v55 = vld [vmem:[#allocation4] sm:$0xf]
    %v56 = vld [vmem:[#allocation4 + $0x4] sm:$0xf]
    %v57 = vld [vmem:[#allocation4 + $0x8] sm:$0xf]
    %v58 = vld [vmem:[#allocation4 + $0xc] sm:$0xf]
    %v59 = vld [vmem:[%s2] sm:$0x1]
    %v61 = vlaneseq
    %v62 = vshrl.u32 %v61, 7
    %v63 = vsub.s32 0, %v62
    %v64 = vrot.slane %v59, %v63
    %v70 = vunpack.c.l.b16 %v55
    %v71 = vunpack.c.l.b16 %v56
    %v72 = vunpack.c.l.b16 %v57
    %v73 = vunpack.c.l.b16 %v58
    %v74 = vpack.c.b16 %v71, %v70
    %v75 = vpack.c.b16 %v73, %v72
    %vm78 = vcmask 261120
    %v80 = vsel %vm78, %v54, 0
    %82 = vmatprep.subr.bf16.mxu0 0
    %83 = vmatpush1.bf16.msra.mxu0 0
    %84 = vmatprep.subr.bf16.mxu0 0
    %85 = vmatpush1.bf16.msra.mxu0 0
    %86 = vmatprep.subr.bf16.mxu0 0
    %87 = vmatpush1.bf16.msra.mxu0 0
    %88 = vmatprep.subr.bf16.mxu0 0
    %89 = vmatpush1.bf16.msra.mxu0 0
    %90 = vmatprep.subr.bf16.mxu0 0
    %91 = vmatpush1.bf16.msra.mxu0 0
    %92 = vmatprep.subr.bf16.mxu0 0
    %93 = vmatpush1.bf16.msra.mxu0 0
    %94 = vmatprep.subr.bf16.mxu0 0
    %95 = vmatpush1.bf16.msra.mxu0 %v75
    %96 = vmatprep.subr.bf16.mxu0 0
    %97 = vmatpush1.bf16.msra.mxu0 %v74
    %98 = vmatprep.subr.bf16.mxu0 0
    %99 = vmatpush2.bf16.msra.mxu0 0
    %100 = vmatprep.subr.bf16.mxu0 0
    %101 = vmatpush2.bf16.msra.mxu0 0
    %102 = vmatprep.subr.bf16.mxu0 0
    %103 = vmatpush2.bf16.msra.mxu0 0
    %104 = vmatprep.subr.bf16.mxu0 0
    %105 = vmatpush2.bf16.msra.mxu0 0
    %106 = vmatprep.subr.bf16.mxu0 0
    %107 = vmatpush2.bf16.msra.mxu0 0
    %108 = vmatprep.subr.bf16.mxu0 0
    %109 = vmatpush2.bf16.msra.mxu0 0
    %110 = vmatprep.subr.bf16.mxu0 0
    %111 = vmatpush2.bf16.msra.mxu0 0
    %112 = vmatprep.subr.bf16.mxu0 0
    %113 = vmatpush2.bf16.msra.mxu0 0
    %114 = vmatprep.mubr.bf16.mxu0 0
    %115 = vmatmul.mubr.bf16.gmra.mxu0 %v80
    %v116 = vpop.f32.mrf.mxu0
    %v117 = vadd.f32 %v64, %v116
    %v118 = vpop.f32.mrf.mxu0
    %v119 = vpop.f32.mrf.mxu0
    %v120 = vpop.f32.mrf.mxu0
    %121 = vdwg.mxu0
    %v122 = vmax.f32 %v117, 0.0
    %v123 = vpack.c.bf16 %v122, %v122
    %v124 = vld [vmem:[%s3] sm:$0xf]
    %v125 = vld [vmem:[%s3 + $0x4] sm:$0xf]
    %v126 = vld [vmem:[%s3 + $0x8] sm:$0xf]
    %v127 = vld [vmem:[%s3 + $0xc] sm:$0xf]
    %v128 = vld [vmem:[%s3 + $0x10] sm:$0xf]
    %v129 = vld [vmem:[%s3 + $0x14] sm:$0xf]
    %v130 = vld [vmem:[%s3 + $0x18] sm:$0xf]
    %v131 = vld [vmem:[%s3 + $0x1c] sm:$0xf]
    %v132 = vld [vmem:[%s4] sm:$0x1]
    %v134 = vlaneseq
    %v135 = vshrl.u32 %v134, 7
    %v136 = vsub.s32 0, %v135
    %v137 = vrot.slane %v132, %v136
    %v147 = vunpack.c.l.b16 %v124
    %v148 = vunpack.c.l.b16 %v125
    %v149 = vunpack.c.l.b16 %v126
    %v150 = vunpack.c.l.b16 %v127
    %v151 = vunpack.c.l.b16 %v128
    %v152 = vunpack.c.l.b16 %v129
    %v153 = vunpack.c.l.b16 %v130
    %v154 = vunpack.c.l.b16 %v131
    %v155 = vpack.c.b16 %v148, %v147
    %v156 = vpack.c.b16 %v150, %v149
    %v157 = vpack.c.b16 %v152, %v151
    %v158 = vpack.c.b16 %v154, %v153
    %vm163 = vcmask 523264
    %v165 = vsel %vm163, %v123, 0
    %167 = vmatprep.subr.bf16.mxu0 0
    %168 = vmatpush1.bf16.msra.mxu0 0
    %169 = vmatprep.subr.bf16.mxu0 0
    %170 = vmatpush1.bf16.msra.mxu0 0
    %171 = vmatprep.subr.bf16.mxu0 0
    %172 = vmatpush1.bf16.msra.mxu0 0
    %173 = vmatprep.subr.bf16.mxu0 0
    %174 = vmatpush1.bf16.msra.mxu0 0
    %175 = vmatprep.subr.bf16.mxu0 0
    %176 = vmatpush1.bf16.msra.mxu0 %v158
    %177 = vmatprep.subr.bf16.mxu0 0
    %178 = vmatpush1.bf16.msra.mxu0 %v157
    %179 = vmatprep.subr.bf16.mxu0 0
    %180 = vmatpush1.bf16.msra.mxu0 %v156
    %181 = vmatprep.subr.bf16.mxu0 0
    %182 = vmatpush1.bf16.msra.mxu0 %v155
    %183 = vmatprep.subr.bf16.mxu0 0
    %184 = vmatpush2.bf16.msra.mxu0 0
    %185 = vmatprep.subr.bf16.mxu0 0
    %186 = vmatpush2.bf16.msra.mxu0 0
    %187 = vmatprep.subr.bf16.mxu0 0
    %188 = vmatpush2.bf16.msra.mxu0 0
    %189 = vmatprep.subr.bf16.mxu0 0
    %190 = vmatpush2.bf16.msra.mxu0 0
    %191 = vmatprep.subr.bf16.mxu0 0
    %192 = vmatpush2.bf16.msra.mxu0 0
    %193 = vmatprep.subr.bf16.mxu0 0
    %194 = vmatpush2.bf16.msra.mxu0 0
    %195 = vmatprep.subr.bf16.mxu0 0
    %196 = vmatpush2.bf16.msra.mxu0 0
    %197 = vmatprep.subr.bf16.mxu0 0
    %198 = vmatpush2.bf16.msra.mxu0 0
    %199 = vmatprep.mubr.bf16.mxu0 0
    %200 = vmatmul.mubr.bf16.gmra.mxu0 %v165
    %v201 = vpop.f32.mrf.mxu0
    %v202 = vadd.f32 %v137, %v201
    %v203 = vpop.f32.mrf.mxu0
    %v204 = vpop.f32.mrf.mxu0
    %v205 = vpop.f32.mrf.mxu0
    %206 = vdwg.mxu0
    %v207 = vmax.f32 %v202, 0.0
    %v208 = vpack.c.bf16 %v207, %v207
    %v209 = vld [vmem:[%s5] sm:$0xf]
    %v210 = vld [vmem:[%s5 + $0x4] sm:$0xf]
    %v211 = vld [vmem:[%s5 + $0x8] sm:$0xf]
    %v212 = vld [vmem:[%s5 + $0xc] sm:$0xf]
    %v213 = vld [vmem:[%s5 + $0x10] sm:$0xf]
    %v214 = vld [vmem:[%s5 + $0x14] sm:$0xf]
    %v215 = vld [vmem:[%s5 + $0x18] sm:$0xf]
    %v216 = vld [vmem:[%s5 + $0x1c] sm:$0xf]
    %v217 = vld [vmem:[%s6] sm:$0x1]
    %v219 = vlaneseq
    %v220 = vshrl.u32 %v219, 7
    %v221 = vsub.s32 0, %v220
    %v222 = vrot.slane %v217, %v221
    %v232 = vunpack.c.l.b16 %v209
    %v233 = vunpack.c.l.b16 %v210
    %v234 = vunpack.c.l.b16 %v211
    %v235 = vunpack.c.l.b16 %v212
    %v236 = vunpack.c.l.b16 %v213
    %v237 = vunpack.c.l.b16 %v214
    %v238 = vunpack.c.l.b16 %v215
    %v239 = vunpack.c.l.b16 %v216
    %v240 = vpack.c.b16 %v233, %v232
    %v241 = vpack.c.b16 %v235, %v234
    %v242 = vpack.c.b16 %v237, %v236
    %v243 = vpack.c.b16 %v239, %v238
    %v249 = vsel %vm163, %v208, 0
    %251 = vmatprep.subr.bf16.mxu0 0
    %252 = vmatpush1.bf16.msra.mxu0 0
    %253 = vmatprep.subr.bf16.mxu0 0
    %254 = vmatpush1.bf16.msra.mxu0 0
    %255 = vmatprep.subr.bf16.mxu0 0
    %256 = vmatpush1.bf16.msra.mxu0 0
    %257 = vmatprep.subr.bf16.mxu0 0
    %258 = vmatpush1.bf16.msra.mxu0 0
    %259 = vmatprep.subr.bf16.mxu0 0
    %260 = vmatpush1.bf16.msra.mxu0 %v243
    %261 = vmatprep.subr.bf16.mxu0 0
    %262 = vmatpush1.bf16.msra.mxu0 %v242
    %263 = vmatprep.subr.bf16.mxu0 0
    %264 = vmatpush1.bf16.msra.mxu0 %v241
    %265 = vmatprep.subr.bf16.mxu0 0
    %266 = vmatpush1.bf16.msra.mxu0 %v240
    %267 = vmatprep.subr.bf16.mxu0 0
    %268 = vmatpush2.bf16.msra.mxu0 0
    %269 = vmatprep.subr.bf16.mxu0 0
    %270 = vmatpush2.bf16.msra.mxu0 0
    %271 = vmatprep.subr.bf16.mxu0 0
    %272 = vmatpush2.bf16.msra.mxu0 0
    %273 = vmatprep.subr.bf16.mxu0 0
    %274 = vmatpush2.bf16.msra.mxu0 0
    %275 = vmatprep.subr.bf16.mxu0 0
    %276 = vmatpush2.bf16.msra.mxu0 0
    %277 = vmatprep.subr.bf16.mxu0 0
    %278 = vmatpush2.bf16.msra.mxu0 0
    %279 = vmatprep.subr.bf16.mxu0 0
    %280 = vmatpush2.bf16.msra.mxu0 0
    %281 = vmatprep.subr.bf16.mxu0 0
    %282 = vmatpush2.bf16.msra.mxu0 0
    %283 = vmatprep.mubr.bf16.mxu0 0
    %284 = vmatmul.mubr.bf16.gmra.mxu0 %v249
    %v285 = vpop.f32.mrf.mxu0
    %v286 = vadd.f32 %v222, %v285
    %v287 = vpop.f32.mrf.mxu0
    %v288 = vpop.f32.mrf.mxu0
    %v289 = vpop.f32.mrf.mxu0
    %290 = vdwg.mxu0
    %vm291 = vcmask 15360
    %292 = vst.msk [vmem:[%s7] sm:$0xff] %vm291, %v286
    // Predicated region
    $region38: #{mlp_forward.1} parent=1 // pred_check
      _
    $region39: #{mlp_forward.1} parent=1 // pred_check_branch
      %294 = sbr.rel (0) target = $region41
    $region40: #{mlp_forward.1} parent=1 // pred_region
      _
    $region41: #{mlp_forward.1} parent=1 // pred_fallthru
      _
    // Predicated region
    $region42: #{mlp_forward.1} parent=1 // pred_check
      _
    $region43: #{mlp_forward.1} parent=1 // pred_check_branch
      %296 = sbr.rel (0) target = $region45
    $region44: #{mlp_forward.1} parent=1 // pred_region
      _
    $region45: #{mlp_forward.1} parent=1 // pred_fallthru
      _
    %297 = vsyncpa [#allocation3], 1
    %298 = vsyncpa [#allocation5], 1

</llo_original>
